<compile_context>
chip_gen: v5e
topology: v5e:2x2
jax: 0.10.0
libtpu: 0.0.40
codegen_flags: <defaults>
</compile_context>

<pallas_src>
import jax
import jax.numpy as jnp
from jax.experimental import pallas as pl
from jax.experimental.pallas import tpu as pltpu


def _copy_kernel(pe_ref, out_ref):
    # Identity: the forward pass simply returns the parameter.
    out_ref[...] = pe_ref[...]


def _pick_layout_and_tile(seq_len: int, hidden_dim: int, dtype) -> tuple[int, int, int]:
    """Choose a lane-dense 2D layout (rows, lanes) and a row-tile size."""
    itemsize = jnp.dtype(dtype).itemsize
    total = seq_len * hidden_dim

    # Lane-dense relayout: make the last (lane) dim a large multiple of 128.
    lanes = None
    if total % 128 == 0:
        for cand in (1024, 512, 256, 128):
            if total % cand == 0:
                lanes = cand
                break
    if lanes is None:
        # Fall back to the natural layout; full-extent last dim is always legal.
        lanes, rows = hidden_dim, seq_len
    else:
        rows = total // lanes

    # Sublane granularity for the second-to-last block dim
    # (8 for 32-bit, 16 for 16-bit, 32 for 8-bit packed dtypes).
    sub = 8 * max(1, 4 // itemsize)

    # Target ~1 MiB per block: double-buffered in+out is ~4 MiB of VMEM
    # (well under v5e's 16 MiB scoped default), and 1 MiB tiles already run a
    # streaming copy near the HBM roofline.
    target_rows = max(sub, ((1 << 20) // max(1, lanes * itemsize)) // sub * sub)
    if rows <= target_rows or rows < sub:
        tile_rows = rows                       # single (full-extent) row block
    else:
        tile_rows = min(target_rows, (rows // sub) * sub)

    return rows, lanes, tile_rows


def fixed_positional_encoding_forward(x: jax.Array, pe: jax.Array) -> jax.Array:
    """Mirror of FixedPositionalEncoding.forward: returns pe, ignoring x.

    x:  (batch, seq_len, hidden_dim)  -- unused (matches PyTorch semantics)
    pe: (1, seq_len, hidden_dim)
    returns: (1, seq_len, hidden_dim), same dtype/values as pe
    """
    del x  # forward() ignores its input
    one, seq_len, hidden_dim = pe.shape
    assert one == 1

    rows, lanes, tile_rows = _pick_layout_and_tile(seq_len, hidden_dim, pe.dtype)
    pe2d = pe.reshape(rows, lanes)  # bit-exact flat relayout (row-major)

    grid = (pl.cdiv(rows, tile_rows),)

    out2d = pl.pallas_call(
        _copy_kernel,
        out_shape=jax.ShapeDtypeStruct((rows, lanes), pe.dtype),
        grid=grid,
        in_specs=[pl.BlockSpec((tile_rows, lanes), lambda i: (i, 0))],
        out_specs=pl.BlockSpec((tile_rows, lanes), lambda i: (i, 0)),
        # Each row-tile is independent: "parallel" lets megacore parts
        # (v7x: 2 TensorCores) shard the streamed copy.
        compiler_params=pltpu.CompilerParams(
            dimension_semantics=("parallel",),
        ),
    )(pe2d)

    # TODO(synk): if the caller can donate `pe`, use input_output_aliases={0: 0}
    # (or skip the kernel and return pe directly) to avoid the redundant HBM
    # read+write of an identity forward.
    return out2d.reshape(1, seq_len, hidden_dim)


def init_params(seq_len: int, hidden_dim: int, key: jax.Array) -> jax.Array:
    # Matches nn.Parameter(torch.empty(1, seq_len, hidden_dim).normal_(std=0.02))
    return 0.02 * jax.random.normal(key, (1, seq_len, hidden_dim), dtype=jnp.float32)


if __name__ == "__main__":
    key = jax.random.PRNGKey(0)
    k_pe, k_x = jax.random.split(key)

    batch, seq_len, hidden_dim = 2, 8, 32

    pe = init_params(seq_len, hidden_dim, k_pe)
    x = jax.random.normal(k_x, (batch, seq_len, hidden_dim), dtype=jnp.float32)

    out = fixed_positional_encoding_forward(x, pe)
    out = jax.block_until_ready(out)

    # Sanity check against the reference semantics (forward returns pe exactly).
    assert out.shape == (1, seq_len, hidden_dim)
    assert out.dtype == pe.dtype
    assert bool(jnp.array_equal(out, pe))

    print("KERNEL_OK")
</pallas_src>

<mosaic_0001>
module attributes {stable_mosaic.version = 11 : i64} {
  func.func @_copy_kernel(%arg0: i32, %arg1: memref<1x256xf32, #tpu.memory_space<vmem>>, %arg2: memref<1x256xf32, #tpu.memory_space<vmem>>) attributes {dimension_semantics = [#tpu.dimension_semantics<parallel>], iteration_bounds = array<i64: 1>, scalar_prefetch = 0 : i64, scratch_operands = 0 : i64, tpu.core_type = #tpu.core_type<tc>, window_params = [{transform_indices = @transform_0, window_bounds = array<i64: 1, 256>}, {transform_indices = @transform_1, window_bounds = array<i64: 1, 256>}]} {
    %c0 = arith.constant 0 : index
    %c0_0 = arith.constant 0 : index
    %0 = vector.load %arg1[%c0, %c0_0] : memref<1x256xf32, #tpu.memory_space<vmem>>, vector<1x256xf32>
    %c0_1 = arith.constant 0 : index
    %c0_2 = arith.constant 0 : index
    %1 = vector.load %arg2[%c0_1, %c0_2] : memref<1x256xf32, #tpu.memory_space<vmem>>, vector<1x256xf32>
    tpu.vector_store %arg2[%c0_1, %c0_2], %0 {strides = array<i32>} : memref<1x256xf32, #tpu.memory_space<vmem>>, vector<1x256xf32>,
    return
  }
  func.func @transform_0(%arg0: i32) -> (i32, i32) {
    %c0_i32 = arith.constant 0 : i32
    %c0_i32_0 = arith.constant 0 : i32
    return %arg0, %c0_i32 : i32, i32
  }
  func.func @transform_1(%arg0: i32) -> (i32, i32) {
    %c0_i32 = arith.constant 0 : i32
    %c0_i32_0 = arith.constant 0 : i32
    return %arg0, %c0_i32 : i32, i32
  }
}

</mosaic_0001>

<llo_original>
// kernel: tpu_custom_call.1
$region0: #{tpu_custom_call.1}
  #allocation0 [shape = 'u32[]', space=smem, size = 0x4, offset = 0x4, fixed_abs, tag = 'smem constant byte address 0x4 - core index']
  #allocation1 [shape = 'u32[72,128]{1,0:T(1,128)}', space=vmem, size = 0x9000, scoped, tag = 'internal scratch']
  %s0 = inlined_call_operand.hbm [shape: f32[1,256], index: 0, kind: input, shape index: {}]
  %s1 = inlined_call_operand.hbm [shape: f32[1,256], index: 1, kind: output, shape index: {}]
  %s2 = sld [smem:[#allocation0]]
  $region18: #{tpu_custom_call.1} parent=0
    _
  %s4 = ssub.s32 1, %s2
  %s5 = scalar_select 0, %s4, %s2
  $region1: #{tpu_custom_call.1} parent=0
    #allocation2 [shape = 'u8[1024]{0}', space=vmem, size = 0x400, scoped, tag = 'input window, operand 0, single buffered']
    #allocation3 [shape = 's32[1]{0}', space=sflag, size = 0x4, scoped, tag = 'scoped memory for tpu_custom_call.1']
    #allocation4 [shape = 's32[1]{0}', space=sflag, size = 0x4, scoped, tag = 'scoped memory for tpu_custom_call.1']
    #allocation5 [shape = 'u8[1024]{0}', space=vmem, size = 0x400, scoped, tag = 'output window, operand 0, single buffered']
    %6 = vsyncpa [#allocation3], 0
    %7 = vsyncpa [#allocation4], 0
    // Predicated region
    $region2: #{tpu_custom_call.1} parent=1 // pred_check
      _
    $region3: #{tpu_custom_call.1} parent=1 // pred_check_branch
      %9 = sbr.rel (0) target = $region5
    $region4: #{tpu_custom_call.1} parent=1 // pred_region
      %11 = vsyncadd [#allocation3], 0
      %s13 = sshll.u32 %s0, 4
      %s14 = int_to_ptr.hbm [resolvable:$true] %s13
      %s15 = sshll.u32 [#allocation2], 4
      %s16 = int_to_ptr.vmem [resolvable:$true] %s15
      %18 = dma.hbm_to_vmem [thread:$0]  %s14, 32, %s16, [#allocation3]
    $region5: #{tpu_custom_call.1} parent=1 // pred_fallthru
      _
    // Predicated region
    $region6: #{tpu_custom_call.1} parent=1 // pred_check
      _
    $region7: #{tpu_custom_call.1} parent=1 // pred_check_branch
      %20 = sbr.rel (0) target = $region9
    $region8: #{tpu_custom_call.1} parent=1 // pred_region
      %22 = dma.done [#allocation3], 32
    $region9: #{tpu_custom_call.1} parent=1 // pred_fallthru
      _
    %v23 = vld [vmem:[#allocation2] sm:$0x3]
    %v24 = vlaneseq
    %vm25 = vcmp.ge.s32.totalorder %v24, 0
    %vm26 = vcmp.lt.s32.totalorder %v24, 256
    %vm27 = vmand %vm25, %vm26
    %28 = vst.msk [vmem:[#allocation5] sm:$0x3] %vm27, %v23
    // Predicated region
    $region10: #{tpu_custom_call.1} parent=1 // pred_check
      _
    $region11: #{tpu_custom_call.1} parent=1 // pred_check_branch
      %30 = sbr.rel (0) target = $region13
    $region12: #{tpu_custom_call.1} parent=1 // pred_region
      %32 = vsyncadd [#allocation4], 0
      %s34 = sshll.u32 [#allocation5], 4
      %s35 = int_to_ptr.vmem [resolvable:$true] %s34
      %s36 = sshll.u32 %s1, 4
      %s37 = int_to_ptr.hbm [resolvable:$true] %s36
      %39 = dma.vmem_to_hbm [thread:$0]  %s35, 32, %s37, [#allocation4]
    $region13: #{tpu_custom_call.1} parent=1 // pred_fallthru
      _
    // Predicated region
    $region14: #{tpu_custom_call.1} parent=1 // pred_check
      _
    $region15: #{tpu_custom_call.1} parent=1 // pred_check_branch
      %41 = sbr.rel (0) target = $region17
    $region16: #{tpu_custom_call.1} parent=1 // pred_region
      %43 = dma.done [#allocation4], 32
    $region17: #{tpu_custom_call.1} parent=1 // pred_fallthru
      _
    %44 = vsyncpa [#allocation3], 1
    %45 = vsyncpa [#allocation4], 1

</llo_original>
